<compile_context>
chip_gen: v6e
topology: v6e:2x2x1
jax: 0.10.0
libtpu: 0.0.40
codegen_flags: <defaults>
</compile_context>

<pallas_src>
import math

import jax
import jax.numpy as jnp
from jax.experimental import pallas as pl
from jax.experimental.pallas import tpu as pltpu


# ----------------------------- Pallas kernel --------------------------------

def _make_resblock_kernel(K, P, C_out, L_out, Nb, use_res):
    """Fused residual-block kernel body (closure over static conv config)."""
    W = Nb * L_out  # lane width of the per-step slab (batch folded into lanes)

    def kernel(r1_ref, a_ref, w2_ref, bn_ref, o_ref, h1_scr):
        # ---- conv1 (BN1 scale folded) + fused 1x1 shortcut (BN scale folded)
        #      in ONE MXU push with contraction depth K*C_in.
        y1 = jnp.dot(a_ref[...], r1_ref[0],
                     preferred_element_type=jnp.float32)   # (Crows, W)
        h1_pre = y1[:C_out, :] if use_res else y1
        h1 = jnp.tanh(h1_pre + bn_ref[0])                   # (C_out, W) f32

        # ---- conv2 (stride 1, pad P), BN2 scale folded into w2 -------------
        # Padded-h1 scratch: write h1 once, zero ONLY the two P-wide halo
        # strips (no full-buffer memset).  Halos are re-zeroed every step so
        # this stays correct per-core under "parallel" semantics.
        if P > 0:
            zhalo = jnp.zeros((C_out, P), h1_scr.dtype)
            h1_scr[:, :P] = zhalo
            h1_scr[:, W + P:W + 2 * P] = zhalo
        h1_scr[:, P:P + W] = h1

        # Batch elements sit in L_out-wide lane segments; the mask keeps each
        # shifted conv2 window inside its own segment (and handles the global
        # ends too).
        t_seg = jax.lax.broadcasted_iota(jnp.int32, (C_out, W), 1) % L_out
        acc = jnp.zeros((C_out, W), jnp.float32)
        for k in range(K):
            d = k - P
            hk = h1_scr[:, k:k + W]                          # (C_out, W)
            if d != 0:
                valid = (t_seg + d >= 0) & (t_seg + d < L_out)
                hk = jnp.where(valid, hk, 0.0)
            acc = acc + jnp.dot(w2_ref[k], hk,
                                preferred_element_type=jnp.float32)

        y = acc + bn_ref[1]                                  # bias = b2 (+ bs)
        if use_res:
            y = y + y1[C_out:, :]                            # shortcut rows
        # Dropout = identity (eval).  Single lane-dense store of the slab.
        o_ref[0] = jnp.tanh(y).astype(o_ref.dtype)

    return kernel


# ------------------------------- JAX glue ------------------------------------

def _bn_affine(gamma, beta, mean, var, eps=1e-5):
    scale = gamma / jnp.sqrt(var + eps)
    bias = beta - mean * scale
    return scale, bias


def residual_block_forward(x, params, kernel_size, stride, use_res):
    """x: (N, C_in, L) f32 -> (N, C_out, L_out) f32 (eval-mode forward)."""
    K, S = kernel_size, stride
    # Even K would make the main path and the pad-0 shortcut disagree on
    # L_out (same problem exists in the PyTorch module) -> only odd K.
    assert K % 2 == 1, "ResidualBlock kernel supports odd kernel_size only"
    P = K // 2
    N, C_in, L = x.shape
    C_out = params["w1"].shape[0]
    L_out = (L + 2 * P - K) // S + 1

    # ---- batching / lane-folding config --------------------------------
    # Fold Nb batch elements into the lane axis of one output slab per grid
    # step.  When N is large enough, pick Nb so that Nb*L_out is a multiple of
    # 128 (unmasked lane-dense stores) while keeping >=2 grid steps for v7x's
    # two TensorCores; for tiny N the whole batch goes into one step (the
    # problem cannot fill even one vreg, so TC-parallelism is moot there).
    lane_quantum = 128 // math.gcd(L_out, 128)   # smallest Nb: Nb*L_out % 128 == 0
    if N >= 2 * lane_quantum:
        Nb = lane_quantum
    else:
        Nb = min(N, lane_quantum)
    G = -(-N // Nb)                              # grid steps
    N_pad = G * Nb
    W = Nb * L_out                               # output lane width per step

    # ---- conv1 window stack (pre-built in the wrapper, K*C_in contraction) --
    x_p = jnp.pad(x.astype(jnp.float32),
                  ((0, N_pad - N), (0, 0), (P, P)))          # (N_pad, C_in, L+2P)
    idx = jnp.arange(L_out)[:, None] * S + jnp.arange(K)[None, :]  # (L_out, K)
    R = x_p[:, :, idx]                                       # (N_pad, C_in, L_out, K)
    R = R.transpose(0, 3, 1, 2).reshape(N_pad, K * C_in, L_out)
    # fold Nb batch elements into the lane axis per grid step
    R = (R.reshape(G, Nb, K * C_in, L_out)
          .transpose(0, 2, 1, 3)
          .reshape(G, K * C_in, W))                          # (G, K*C_in, W)

    # ---- fold BN scales into the weights; stack shortcut rows under conv1 ---
    s1, b1 = _bn_affine(params["bn1_g"], params["bn1_b"],
                        params["bn1_mean"], params["bn1_var"])
    s2, b2 = _bn_affine(params["bn2_g"], params["bn2_b"],
                        params["bn2_mean"], params["bn2_var"])
    w1f = params["w1"] * s1[:, None, None]                   # (C_out, C_in, K)
    A = w1f.transpose(0, 2, 1).reshape(C_out, K * C_in)      # A[c, k*C_in+ci]
    b_out = b2
    if use_res:
        ss, bs = _bn_affine(params["bns_g"], params["bns_b"],
                            params["bns_mean"], params["bns_var"])
        wsf = params["ws"][:, :, 0] * ss[:, None]            # (C_out, C_in)
        Ash = jnp.zeros((C_out, K, C_in), jnp.float32).at[:, P, :].set(wsf)
        A = jnp.concatenate([A, Ash.reshape(C_out, K * C_in)], axis=0)
        b_out = b2 + bs
    A = A.astype(jnp.float32)                                # (Crows, K*C_in)
    Crows = A.shape[0]

    w2s = (params["w2"] * s2[:, None, None]).transpose(2, 0, 1)  # (K, C_out, C_out)
    w2s = w2s.astype(jnp.float32)
    bn = jnp.stack([b1, b_out]).astype(jnp.float32)[..., None]   # (2, C_out, 1)

    # ---- VMEM budget (depth-2 pipeline must also fit v7x's 64 MiB/TC) -------
    per_step_bytes = 4 * (K * C_in * W            # conv1 window block
                          + Crows * K * C_in      # fused LHS
                          + K * C_out * C_out     # w2
                          + 2 * C_out             # biases
                          + C_out * W             # output block
                          + C_out * (W + 2 * P))  # h1 scratch
    vmem_limit = min(64 * 1024 * 1024,
                     max(4 * 1024 * 1024, 4 * per_step_bytes))

    kernel = _make_resblock_kernel(K, P, C_out, L_out, Nb, use_res)

    out = pl.pallas_call(
        kernel,
        out_shape=jax.ShapeDtypeStruct((G, C_out, W), jnp.float32),
        grid=(G,),
        in_specs=[
            pl.BlockSpec((1, K * C_in, W), lambda g: (g, 0, 0)),
            pl.BlockSpec((Crows, K * C_in), lambda g: (0, 0)),
            pl.BlockSpec((K, C_out, C_out), lambda g: (0, 0, 0)),
            pl.BlockSpec((2, C_out, 1), lambda g: (0, 0, 0)),
        ],
        out_specs=pl.BlockSpec((1, C_out, W), lambda g: (g, 0, 0)),
        scratch_shapes=[pltpu.VMEM((C_out, W + 2 * P), jnp.float32)],
        compiler_params=pltpu.CompilerParams(
            dimension_semantics=("parallel",),
            vmem_limit_bytes=vmem_limit),
    )(R, A, w2s, bn)

    # (G, C_out, Nb*L_out) -> (N, C_out, L_out)   (tiny wrapper-side reshuffle)
    out = (out.reshape(G, C_out, Nb, L_out)
              .transpose(0, 2, 1, 3)
              .reshape(N_pad, C_out, L_out)[:N])
    return out  # Dropout: identity in eval mode.
    # TODO(synk): emit bf16 output here if the downstream consumer tolerates it
    #             (halves the dominant HBM writeback).


# --------------------------- pure-JAX reference ------------------------------

def _ref_conv1d(x, w, stride, pad):
    return jax.lax.conv_general_dilated(
        x, w, window_strides=(stride,), padding=[(pad, pad)],
        dimension_numbers=("NCH", "OIH", "NCH"))


def residual_block_reference(x, params, kernel_size, stride, use_res):
    K = kernel_size
    P = K // 2
    eps = 1e-5

    def bn(y, g, b, m, v):
        return (y - m[None, :, None]) / jnp.sqrt(v[None, :, None] + eps) \
            * g[None, :, None] + b[None, :, None]

    h = _ref_conv1d(x, params["w1"], stride, P)
    h = jnp.tanh(bn(h, params["bn1_g"], params["bn1_b"],
                    params["bn1_mean"], params["bn1_var"]))
    h = _ref_conv1d(h, params["w2"], 1, P)
    out = bn(h, params["bn2_g"], params["bn2_b"],
             params["bn2_mean"], params["bn2_var"])
    if use_res:
        r = _ref_conv1d(x, params["ws"], stride, 0)
        out = out + bn(r, params["bns_g"], params["bns_b"],
                       params["bns_mean"], params["bns_var"])
    return jnp.tanh(out)


# --------------------------------- main ---------------------------------------

if __name__ == "__main__":
    inchannel, outchannel = 4, 8
    kernel_size, stride = 3, 2
    use_res, dropout = True, 0.1
    N, L = 2, 16

    key = jax.random.PRNGKey(0)
    keys = jax.random.split(key, 10)

    params = {
        "w1": 0.1 * jax.random.normal(keys[0], (outchannel, inchannel, kernel_size), jnp.float32),
        "w2": 0.1 * jax.random.normal(keys[1], (outchannel, outchannel, kernel_size), jnp.float32),
        "ws": 0.1 * jax.random.normal(keys[2], (outchannel, inchannel, 1), jnp.float32),
        "bn1_g": 1.0 + 0.1 * jax.random.normal(keys[3], (outchannel,), jnp.float32),
        "bn1_b": 0.1 * jax.random.normal(keys[4], (outchannel,), jnp.float32),
        "bn2_g": 1.0 + 0.1 * jax.random.normal(keys[5], (outchannel,), jnp.float32),
        "bn2_b": 0.1 * jax.random.normal(keys[6], (outchannel,), jnp.float32),
        "bns_g": 1.0 + 0.1 * jax.random.normal(keys[7], (outchannel,), jnp.float32),
        "bns_b": 0.1 * jax.random.normal(keys[8], (outchannel,), jnp.float32),
        # running stats of a fresh module
        "bn1_mean": jnp.zeros((outchannel,), jnp.float32),
        "bn1_var": jnp.ones((outchannel,), jnp.float32),
        "bn2_mean": jnp.zeros((outchannel,), jnp.float32),
        "bn2_var": jnp.ones((outchannel,), jnp.float32),
        "bns_mean": jnp.zeros((outchannel,), jnp.float32),
        "bns_var": jnp.ones((outchannel,), jnp.float32),
    }

    x = jax.random.normal(keys[9], (N, inchannel, L), jnp.float32)

    out = residual_block_forward(x, params, kernel_size, stride, use_res)
    out = jax.block_until_ready(out)

    ref = residual_block_reference(x, params, kernel_size, stride, use_res)
    ref = jax.block_until_ready(ref)

    assert out.shape == ref.shape, (out.shape, ref.shape)
    # f32 MXU operands; tolerance covers default TPU matmul precision.
    max_err = float(jnp.max(jnp.abs(out - ref)))
    assert max_err < 2e-2, f"max abs error {max_err}"

    print("KERNEL_OK")
</pallas_src>

<mosaic_0001>
module attributes {stable_mosaic.version = 11 : i64} {
  func.func @kernel(%arg0: i32, %arg1: memref<1x12x16xf32, #tpu.memory_space<vmem>>, %arg2: memref<16x12xf32, #tpu.memory_space<vmem>>, %arg3: memref<3x8x8xf32, #tpu.memory_space<vmem>>, %arg4: memref<2x8x1xf32, #tpu.memory_space<vmem>>, %arg5: memref<1x8x16xf32, #tpu.memory_space<vmem>>, %arg6: memref<8x18xf32, #tpu.memory_space<vmem>>) attributes {dimension_semantics = [#tpu.dimension_semantics<parallel>], iteration_bounds = array<i64: 1>, scalar_prefetch = 0 : i64, scratch_operands = 1 : i64, tpu.core_type = #tpu.core_type<tc>, window_params = [{transform_indices = @transform_0, window_bounds = array<i64: 1, 12, 16>}, {pipeline_mode = #tpu.pipeline_mode<synchronous>, transform_indices = @transform_1, window_bounds = array<i64: 16, 12>}, {pipeline_mode = #tpu.pipeline_mode<synchronous>, transform_indices = @transform_2, window_bounds = array<i64: 3, 8, 8>}, {pipeline_mode = #tpu.pipeline_mode<synchronous>, transform_indices = @transform_3, window_bounds = array<i64: 2, 8, 1>}, {transform_indices = @transform_4, window_bounds = array<i64: 1, 8, 16>}]} {
    %c0 = arith.constant 0 : index
    %c0_0 = arith.constant 0 : index
    %0 = vector.load %arg2[%c0, %c0_0] : memref<16x12xf32, #tpu.memory_space<vmem>>, vector<16x12xf32>
    %c0_1 = arith.constant 0 : index
    %c0_2 = arith.constant 0 : index
    %c0_3 = arith.constant 0 : index
    %1 = vector.load %arg1[%c0_1, %c0_2, %c0_3] : memref<1x12x16xf32, #tpu.memory_space<vmem>>, vector<1x12x16xf32>
    %2 = vector.shape_cast %1 : vector<1x12x16xf32> to vector<12x16xf32>
    %cst = arith.constant dense<0.000000e+00> : vector<16x16xf32>
    %3 = tpu.matmul %0, %2, %cst {dimension_numbers = #tpu.dot_dimension_numbers<[1], [0], [0], [1], [0, 0, 1, 1], [], []>} : vector<16x12xf32>, vector<12x16xf32>, vector<16x16xf32> -> vector<16x16xf32>
    %4 = vector.extract_strided_slice %3 {offsets = [0, 0], sizes = [8, 16], strides = [1, 1]} : vector<16x16xf32> to vector<8x16xf32>
    %c0_4 = arith.constant 0 : index
    %c0_5 = arith.constant 0 : index
    %c0_6 = arith.constant 0 : index
    %5 = vector.load %arg4[%c0_4, %c0_5, %c0_6] : memref<2x8x1xf32, #tpu.memory_space<vmem>>, vector<1x8x1xf32>
    %6 = vector.shape_cast %5 : vector<1x8x1xf32> to vector<8x1xf32>
    %7 = vector.broadcast %6 : vector<8x1xf32> to vector<8x16xf32>
    %8 = arith.addf %4, %7 : vector<8x16xf32>
    %9 = math.tanh %8 : vector<8x16xf32>
    %cst_7 = arith.constant 0.000000e+00 : f32
    %10 = vector.broadcast %cst_7 : f32 to vector<8x1xf32>
    %c0_8 = arith.constant 0 : index
    %c0_9 = arith.constant 0 : index
    %11 = vector.load %arg6[%c0_8, %c0_9] : memref<8x18xf32, #tpu.memory_space<vmem>>, vector<8x1xf32>
    tpu.vector_store %arg6[%c0_8, %c0_9], %10 {strides = array<i32>} : memref<8x18xf32, #tpu.memory_space<vmem>>, vector<8x1xf32>,
    %c0_10 = arith.constant 0 : index
    %c17 = arith.constant 17 : index
    %12 = vector.load %arg6[%c0_10, %c17] : memref<8x18xf32, #tpu.memory_space<vmem>>, vector<8x1xf32>
    tpu.vector_store %arg6[%c0_10, %c17], %10 {strides = array<i32>} : memref<8x18xf32, #tpu.memory_space<vmem>>, vector<8x1xf32>,
    %c0_11 = arith.constant 0 : index
    %c1 = arith.constant 1 : index
    %13 = vector.load %arg6[%c0_11, %c1] : memref<8x18xf32, #tpu.memory_space<vmem>>, vector<8x16xf32>
    tpu.vector_store %arg6[%c0_11, %c1], %9 {strides = array<i32>} : memref<8x18xf32, #tpu.memory_space<vmem>>, vector<8x16xf32>,
    %14 = tpu.iota {dimensions = array<i32: 1>} : vector<8x16xi32>
    %c8_i32 = arith.constant 8 : i32
    %c0_i32 = arith.constant 0 : i32
    %15 = arith.cmpi eq, %c8_i32, %c0_i32 : i32
    %c1_i32 = arith.constant 1 : i32
    %16 = arith.select %15, %c1_i32, %c8_i32 : i32
    %17 = vector.broadcast %16 : i32 to vector<8x16xi32>
    %18 = arith.remsi %14, %17 : vector<8x16xi32>
    %c0_i32_12 = arith.constant 0 : i32
    %19 = vector.broadcast %c0_i32_12 : i32 to vector<8x16xi32>
    %20 = arith.cmpi ne, %18, %19 : vector<8x16xi32>
    %c0_i32_13 = arith.constant 0 : i32
    %21 = vector.broadcast %c0_i32_13 : i32 to vector<8x16xi32>
    %22 = arith.cmpi slt, %18, %21 : vector<8x16xi32>
    %c0_i32_14 = arith.constant 0 : i32
    %23 = arith.cmpi slt, %16, %c0_i32_14 : i32
    %24 = vector.broadcast %23 : i1 to vector<8x16xi1>
    %25 = vector.broadcast %24 : vector<8x16xi1> to vector<8x16xi1>
    %26 = arith.xori %22, %25 : vector<8x16xi1>
    %27 = arith.andi %26, %20 : vector<8x16xi1>
    %28 = vector.broadcast %16 : i32 to vector<8x16xi32>
    %29 = arith.addi %18, %28 : vector<8x16xi32>
    %30 = arith.select %27, %29, %18 : vector<8x16xi1>, vector<8x16xi32>
    %cst_15 = arith.constant 0.000000e+00 : f32
    %31 = vector.broadcast %cst_15 : f32 to vector<8x16xf32>
    %c0_16 = arith.constant 0 : index
    %c0_17 = arith.constant 0 : index
    %32 = vector.load %arg6[%c0_16, %c0_17] : memref<8x18xf32, #tpu.memory_space<vmem>>, vector<8x16xf32>
    %c-1_i32 = arith.constant -1 : i32
    %33 = vector.broadcast %c-1_i32 : i32 to vector<8x16xi32>
    %34 = arith.addi %30, %33 : vector<8x16xi32>
    %c0_i32_18 = arith.constant 0 : i32
    %35 = vector.broadcast %c0_i32_18 : i32 to vector<8x16xi32>
    %36 = arith.cmpi sge, %34, %35 : vector<8x16xi32>
    %c-1_i32_19 = arith.constant -1 : i32
    %37 = vector.broadcast %c-1_i32_19 : i32 to vector<8x16xi32>
    %38 = arith.addi %30, %37 : vector<8x16xi32>
    %c8_i32_20 = arith.constant 8 : i32
    %39 = vector.broadcast %c8_i32_20 : i32 to vector<8x16xi32>
    %40 = arith.cmpi slt, %38, %39 : vector<8x16xi32>
    %41 = arith.andi %36, %40 : vector<8x16xi1>
    %cst_21 = arith.constant 0.000000e+00 : f32
    %42 = vector.broadcast %cst_21 : f32 to vector<8x16xf32>
    %43 = arith.select %41, %32, %42 : vector<8x16xi1>, vector<8x16xf32>
    %c0_22 = arith.constant 0 : index
    %c0_23 = arith.constant 0 : index
    %c0_24 = arith.constant 0 : index
    %44 = vector.load %arg3[%c0_22, %c0_23, %c0_24] : memref<3x8x8xf32, #tpu.memory_space<vmem>>, vector<1x8x8xf32>
    %45 = vector.shape_cast %44 : vector<1x8x8xf32> to vector<8x8xf32>
    %cst_25 = arith.constant dense<0.000000e+00> : vector<8x16xf32>
    %46 = tpu.matmul %45, %43, %cst_25 {dimension_numbers = #tpu.dot_dimension_numbers<[1], [0], [0], [1], [0, 0, 1, 1], [], []>} : vector<8x8xf32>, vector<8x16xf32>, vector<8x16xf32> -> vector<8x16xf32>
    %47 = arith.addf %31, %46 : vector<8x16xf32>
    %c0_26 = arith.constant 0 : index
    %c1_27 = arith.constant 1 : index
    %48 = vector.load %arg6[%c0_26, %c1_27] : memref<8x18xf32, #tpu.memory_space<vmem>>, vector<8x16xf32>
    %c1_28 = arith.constant 1 : index
    %c0_29 = arith.constant 0 : index
    %c0_30 = arith.constant 0 : index
    %49 = vector.load %arg3[%c1_28, %c0_29, %c0_30] : memref<3x8x8xf32, #tpu.memory_space<vmem>>, vector<1x8x8xf32>
    %50 = vector.shape_cast %49 : vector<1x8x8xf32> to vector<8x8xf32>
    %cst_31 = arith.constant dense<0.000000e+00> : vector<8x16xf32>
    %51 = tpu.matmul %50, %48, %cst_31 {dimension_numbers = #tpu.dot_dimension_numbers<[1], [0], [0], [1], [0, 0, 1, 1], [], []>} : vector<8x8xf32>, vector<8x16xf32>, vector<8x16xf32> -> vector<8x16xf32>
    %52 = arith.addf %47, %51 : vector<8x16xf32>
    %c0_32 = arith.constant 0 : index
    %c2 = arith.constant 2 : index
    %53 = vector.load %arg6[%c0_32, %c2] : memref<8x18xf32, #tpu.memory_space<vmem>>, vector<8x16xf32>
    %c1_i32_33 = arith.constant 1 : i32
    %54 = vector.broadcast %c1_i32_33 : i32 to vector<8x16xi32>
    %55 = arith.addi %30, %54 : vector<8x16xi32>
    %c0_i32_34 = arith.constant 0 : i32
    %56 = vector.broadcast %c0_i32_34 : i32 to vector<8x16xi32>
    %57 = arith.cmpi sge, %55, %56 : vector<8x16xi32>
    %c1_i32_35 = arith.constant 1 : i32
    %58 = vector.broadcast %c1_i32_35 : i32 to vector<8x16xi32>
    %59 = arith.addi %30, %58 : vector<8x16xi32>
    %c8_i32_36 = arith.constant 8 : i32
    %60 = vector.broadcast %c8_i32_36 : i32 to vector<8x16xi32>
    %61 = arith.cmpi slt, %59, %60 : vector<8x16xi32>
    %62 = arith.andi %57, %61 : vector<8x16xi1>
    %cst_37 = arith.constant 0.000000e+00 : f32
    %63 = vector.broadcast %cst_37 : f32 to vector<8x16xf32>
    %64 = arith.select %62, %53, %63 : vector<8x16xi1>, vector<8x16xf32>
    %c2_38 = arith.constant 2 : index
    %c0_39 = arith.constant 0 : index
    %c0_40 = arith.constant 0 : index
    %65 = vector.load %arg3[%c2_38, %c0_39, %c0_40] : memref<3x8x8xf32, #tpu.memory_space<vmem>>, vector<1x8x8xf32>
    %66 = vector.shape_cast %65 : vector<1x8x8xf32> to vector<8x8xf32>
    %cst_41 = arith.constant dense<0.000000e+00> : vector<8x16xf32>
    %67 = tpu.matmul %66, %64, %cst_41 {dimension_numbers = #tpu.dot_dimension_numbers<[1], [0], [0], [1], [0, 0, 1, 1], [], []>} : vector<8x8xf32>, vector<8x16xf32>, vector<8x16xf32> -> vector<8x16xf32>
    %68 = arith.addf %52, %67 : vector<8x16xf32>
    %c1_42 = arith.constant 1 : index
    %c0_43 = arith.constant 0 : index
    %c0_44 = arith.constant 0 : index
    %69 = vector.load %arg4[%c1_42, %c0_43, %c0_44] : memref<2x8x1xf32, #tpu.memory_space<vmem>>, vector<1x8x1xf32>
    %70 = vector.shape_cast %69 : vector<1x8x1xf32> to vector<8x1xf32>
    %71 = vector.broadcast %70 : vector<8x1xf32> to vector<8x16xf32>
    %72 = arith.addf %68, %71 : vector<8x16xf32>
    %73 = vector.extract_strided_slice %3 {offsets = [8, 0], sizes = [8, 16], strides = [1, 1]} : vector<16x16xf32> to vector<8x16xf32>
    %74 = arith.addf %72, %73 : vector<8x16xf32>
    %75 = math.tanh %74 : vector<8x16xf32>
    %c0_45 = arith.constant 0 : index
    %c0_46 = arith.constant 0 : index
    %c0_47 = arith.constant 0 : index
    %76 = vector.load %arg5[%c0_45, %c0_46, %c0_47] : memref<1x8x16xf32, #tpu.memory_space<vmem>>, vector<1x8x16xf32>
    %77 = vector.shape_cast %76 : vector<1x8x16xf32> to vector<8x16xf32>
    %78 = vector.shape_cast %75 : vector<8x16xf32> to vector<1x8x16xf32>
    tpu.vector_store %arg5[%c0_45, %c0_46, %c0_47], %78 {strides = array<i32>} : memref<1x8x16xf32, #tpu.memory_space<vmem>>, vector<1x8x16xf32>,
    return
  }
  func.func @transform_0(%arg0: i32) -> (i32, i32, i32) {
    %c0_i32 = arith.constant 0 : i32
    %c0_i32_0 = arith.constant 0 : i32
    %c0_i32_1 = arith.constant 0 : i32
    return %arg0, %c0_i32, %c0_i32_0 : i32, i32, i32
  }
  func.func @transform_1(%arg0: i32) -> (i32, i32) {
    %c0_i32 = arith.constant 0 : i32
    %c0_i32_0 = arith.constant 0 : i32
    %c0_i32_1 = arith.constant 0 : i32
    return %c0_i32, %c0_i32_0 : i32, i32
  }
  func.func @transform_2(%arg0: i32) -> (i32, i32, i32) {
    %c0_i32 = arith.constant 0 : i32
    %c0_i32_0 = arith.constant 0 : i32
    %c0_i32_1 = arith.constant 0 : i32
    %c0_i32_2 = arith.constant 0 : i32
    return %c0_i32, %c0_i32_0, %c0_i32_1 : i32, i32, i32
  }
  func.func @transform_3(%arg0: i32) -> (i32, i32, i32) {
    %c0_i32 = arith.constant 0 : i32
    %c0_i32_0 = arith.constant 0 : i32
    %c0_i32_1 = arith.constant 0 : i32
    %c0_i32_2 = arith.constant 0 : i32
    return %c0_i32, %c0_i32_0, %c0_i32_1 : i32, i32, i32
  }
  func.func @transform_4(%arg0: i32) -> (i32, i32, i32) {
    %c0_i32 = arith.constant 0 : i32
    %c0_i32_0 = arith.constant 0 : i32
    %c0_i32_1 = arith.constant 0 : i32
    return %arg0, %c0_i32, %c0_i32_0 : i32, i32, i32
  }
}

</mosaic_0001>

<llo_original>
// kernel: tpu_custom_call.1
$region0: #{tpu_custom_call.1}
  #allocation0 [shape = 'u32[]', space=smem, size = 0x4, offset = 0x4, fixed_abs, tag = 'smem constant byte address 0x4 - core index']
  #allocation1 [shape = 'u32[144,128]{1,0:T(1,128)}', space=vmem, size = 0x12000, scoped, tag = 'internal scratch']
  #allocation2 [shape = 'f32[8,18]{1,0:T(8,128)}', space=vmem, size = 0x1000, scoped, tag = 'scratch operand']
  %s0 = inlined_call_operand.vmem [shape: f32[1,12,16], index: 0, kind: input, shape index: {}]
  %s1 = inlined_call_operand.vmem [shape: f32[16,12], index: 1, kind: input, shape index: {}]
  %s2 = inlined_call_operand.vmem [shape: f32[3,8,8], index: 2, kind: input, shape index: {}]
  %s3 = inlined_call_operand.vmem [shape: f32[2,8,1], index: 3, kind: input, shape index: {}]
  %s4 = inlined_call_operand.hbm [shape: f32[1,8,16], index: 4, kind: output, shape index: {}]
  %s5 = sld [smem:[#allocation0]]
  $region26: #{tpu_custom_call.1} parent=0
    _
  %s7 = ssub.s32 1, %s5
  %s8 = scalar_select 0, %s7, %s5
  $region1: #{tpu_custom_call.1} parent=0
    #allocation3 [shape = 'u8[4096]{0}', space=vmem, size = 0x1000, scoped, tag = 'output window, operand 0, single buffered']
    #allocation4 [shape = 's32[1]{0}', space=sflag, size = 0x4, scoped, tag = 'scoped memory for tpu_custom_call.1']
    %9 = vsyncpa [#allocation4], 0
    // Predicated region
    $region2: #{tpu_custom_call.1} parent=1 // pred_check
      _
    $region3: #{tpu_custom_call.1} parent=1 // pred_check_branch
      %11 = sbr.rel (0) target = $region5
    $region4: #{tpu_custom_call.1} parent=1 // pred_region
      _
    $region5: #{tpu_custom_call.1} parent=1 // pred_fallthru
      _
    // Predicated region
    $region6: #{tpu_custom_call.1} parent=1 // pred_check
      _
    $region7: #{tpu_custom_call.1} parent=1 // pred_check_branch
      %13 = sbr.rel (0) target = $region9
    $region8: #{tpu_custom_call.1} parent=1 // pred_region
      _
    $region9: #{tpu_custom_call.1} parent=1 // pred_fallthru
      _
    // Predicated region
    $region10: #{tpu_custom_call.1} parent=1 // pred_check
      _
    $region11: #{tpu_custom_call.1} parent=1 // pred_check_branch
      %15 = sbr.rel (0) target = $region13
    $region12: #{tpu_custom_call.1} parent=1 // pred_region
      _
    $region13: #{tpu_custom_call.1} parent=1 // pred_fallthru
      _
    // Predicated region
    $region14: #{tpu_custom_call.1} parent=1 // pred_check
      _
    $region15: #{tpu_custom_call.1} parent=1 // pred_check_branch
      %17 = sbr.rel (0) target = $region17
    $region16: #{tpu_custom_call.1} parent=1 // pred_region
      _
    $region17: #{tpu_custom_call.1} parent=1 // pred_fallthru
      _
    %v18 = vld [vmem:[%s1] sm:$0xff]
    %v19 = vld [vmem:[%s1 + $0x8] sm:$0xff]
    %v20 = vld [vmem:[%s0] sm:$0xff]
    %v21 = vld [vmem:[%s0 + $0x8] sm:$0xf]
    %vm22 = vcmask 97280
    %v24 = vsel %vm22, %v18, 0
    %v27 = vsel %vm22, %v19, 0
    %vm29 = vcmask 1043456
    %v31 = vsel %vm29, %v21, 0
    %33 = vmatprep.subr.mxu0 0.0
    %34 = vmatpush1.msra.mxu0 0.0
    %35 = vmatprep.subr.mxu0 0.0
    %36 = vmatpush1.msra.mxu0 0.0
    %37 = vmatprep.subr.mxu0 0.0
    %38 = vmatpush1.msra.mxu0 0.0
    %39 = vmatprep.subr.mxu0 0.0
    %40 = vmatpush1.msra.mxu0 0.0
    %41 = vmatprep.subr.mxu0 0.0
    %42 = vmatpush1.msra.mxu0 0.0
    %43 = vmatprep.subr.mxu0 0.0
    %44 = vmatpush1.msra.mxu0 0.0
    %45 = vmatprep.subr.mxu0 0.0
    %46 = vmatpush1.msra.mxu0 0.0
    %47 = vmatprep.subr.mxu0 0.0
    %48 = vmatpush1.msra.mxu0 0.0
    %49 = vmatprep.subr.mxu0 0.0
    %50 = vmatpush1.msra.mxu0 0.0
    %51 = vmatprep.subr.mxu0 0.0
    %52 = vmatpush1.msra.mxu0 0.0
    %53 = vmatprep.subr.mxu0 0.0
    %54 = vmatpush1.msra.mxu0 0.0
    %55 = vmatprep.subr.mxu0 0.0
    %56 = vmatpush1.msra.mxu0 0.0
    %57 = vmatprep.subr.mxu0 0.0
    %58 = vmatpush1.msra.mxu0 0.0
    %59 = vmatprep.subr.mxu0 0.0
    %60 = vmatpush1.msra.mxu0 0.0
    %61 = vmatprep.subr.mxu0 0.0
    %62 = vmatpush1.msra.mxu0 %v31
    %63 = vmatprep.subr.mxu0 0.0
    %64 = vmatpush1.msra.mxu0 %v20
    %65 = vmatprep.subr.mxu0 0.0
    %66 = vmatpush2.msra.mxu0 0.0
    %67 = vmatprep.subr.mxu0 0.0
    %68 = vmatpush2.msra.mxu0 0.0
    %69 = vmatprep.subr.mxu0 0.0
    %70 = vmatpush2.msra.mxu0 0.0
    %71 = vmatprep.subr.mxu0 0.0
    %72 = vmatpush2.msra.mxu0 0.0
    %73 = vmatprep.subr.mxu0 0.0
    %74 = vmatpush2.msra.mxu0 0.0
    %75 = vmatprep.subr.mxu0 0.0
    %76 = vmatpush2.msra.mxu0 0.0
    %77 = vmatprep.subr.mxu0 0.0
    %78 = vmatpush2.msra.mxu0 0.0
    %79 = vmatprep.subr.mxu0 0.0
    %80 = vmatpush2.msra.mxu0 0.0
    %81 = vmatprep.subr.mxu0 0.0
    %82 = vmatpush2.msra.mxu0 0.0
    %83 = vmatprep.subr.mxu0 0.0
    %84 = vmatpush2.msra.mxu0 0.0
    %85 = vmatprep.subr.mxu0 0.0
    %86 = vmatpush2.msra.mxu0 0.0
    %87 = vmatprep.subr.mxu0 0.0
    %88 = vmatpush2.msra.mxu0 0.0
    %89 = vmatprep.subr.mxu0 0.0
    %90 = vmatpush2.msra.mxu0 0.0
    %91 = vmatprep.subr.mxu0 0.0
    %92 = vmatpush2.msra.mxu0 0.0
    %93 = vmatprep.subr.mxu0 0.0
    %94 = vmatpush2.msra.mxu0 0.0
    %95 = vmatprep.subr.mxu0 0.0
    %96 = vmatpush2.msra.mxu0 0.0
    %97 = vmatprep.mubr.f32.mxu0 0.0
    %98 = vmatmul.mubr.f32.gmra.mxu0 %v24
    %v99 = vpop.f32.mrf.mxu0
    %v100 = vadd.f32 0.0, %v99
    %v101 = vpop.f32.mrf.mxu0
    %102 = vmatprep.mubr.f32.mxu0 0.0
    %103 = vmatmul.mubr.f32.gmra.mxu0 %v27
    %v104 = vpop.f32.mrf.mxu0
    %v105 = vadd.f32 0.0, %v104
    %v106 = vpop.f32.mrf.mxu0
    %107 = vdwg.mxu0
    %v108 = vld [vmem:[%s3] sm:$0xff]
    %110 = vset.pattern.permute.xlu0 0
    %111 = vperm.xlu0 %110, %v108
    %v112 = vpop.permute.xlu0 %111
    %v114 = vadd.f32 %v100, %v112
    %v115 = vtanh.pop %v114
    %vm116 = vcmask 7168
    %117 = vst.msk [vmem:[#allocation2] sm:$0xff] %vm116, 0.0
    %vm118 = vcmask 146568
    %119 = vst.msk [vmem:[#allocation2] sm:$0xff] %vm118, 0.0
    %121 = vrot.lane.b32.xlu0 %v115, 1
    %v122 = vpop.permute.xlu0 %121
    %vm124 = vcmask 138248
    %125 = vst.msk [vmem:[#allocation2] sm:$0xff] %vm124, %v122
    %v126 = vlaneseq
    %v127 = vand.u32 %v126, 127
    %vm128 = vcmp.lt.s32.totalorder %v127, 0
    %v129 = vsub.s32 0, %v127
    %v130 = vsel %vm128, %v129, %v127
    %v131 = vshrl.u32 %v130, 3
    %v132 = vand.u32 %v130, 7
    %v133 = vsub.s32 0, %v132
    %v134 = vsel %vm128, %v133, %v132
    %vm135 = vcmp.ne.s32.totalorder %v134, 0
    %vm136 = vcmp.lt.s32.totalorder %v134, 0
    %vm137 = vmand %vm136, %vm135
    %v138 = vadd.s32 %v134, 8
    %v139 = vsel %vm137, %v138, %v134
    %v140 = vld [vmem:[#allocation2] sm:$0xff]
    %v141 = vadd.s32 %v139, 4294967295
    %vm142 = vcmp.ge.s32.totalorder %v141, 0
    %vm143 = vcmp.lt.s32.totalorder %v141, 8
    %vm144 = vmand %vm142, %vm143
    %v145 = vsel %vm144, %v140, 0.0
    %v146 = vld [vmem:[%s2] sm:$0xff]
    %s147 = scalar_lea.vmem %s2, 8
    %v148 = vld [vmem:[%s147] sm:$0xff]
    %150 = vrot.lane.b32.xlu0 %v140, 127
    %v151 = vpop.permute.xlu0 %150
    %vm153 = vcmask 64512
    %v155 = vsel %vm153, %v148, 0
    %157 = vmatprep.subr.mxu0 0.0
    %158 = vmatpush1.msra.mxu0 0.0
    %159 = vmatprep.subr.mxu0 0.0
    %160 = vmatpush1.msra.mxu0 0.0
    %161 = vmatprep.subr.mxu0 0.0
    %162 = vmatpush1.msra.mxu0 0.0
    %163 = vmatprep.subr.mxu0 0.0
    %164 = vmatpush1.msra.mxu0 0.0
    %165 = vmatprep.subr.mxu0 0.0
    %166 = vmatpush1.msra.mxu0 0.0
    %167 = vmatprep.subr.mxu0 0.0
    %168 = vmatpush1.msra.mxu0 0.0
    %169 = vmatprep.subr.mxu0 0.0
    %170 = vmatpush1.msra.mxu0 0.0
    %171 = vmatprep.subr.mxu0 0.0
    %172 = vmatpush1.msra.mxu0 0.0
    %173 = vmatprep.subr.mxu0 0.0
    %174 = vmatpush1.msra.mxu0 0.0
    %175 = vmatprep.subr.mxu0 0.0
    %176 = vmatpush1.msra.mxu0 0.0
    %177 = vmatprep.subr.mxu0 0.0
    %178 = vmatpush1.msra.mxu0 0.0
    %179 = vmatprep.subr.mxu0 0.0
    %180 = vmatpush1.msra.mxu0 0.0
    %181 = vmatprep.subr.mxu0 0.0
    %182 = vmatpush1.msra.mxu0 0.0
    %183 = vmatprep.subr.mxu0 0.0
    %184 = vmatpush1.msra.mxu0 0.0
    %185 = vmatprep.subr.mxu0 0.0
    %186 = vmatpush1.msra.mxu0 0.0
    %187 = vmatprep.subr.mxu0 0.0
    %188 = vmatpush1.msra.mxu0 %v151
    %189 = vmatprep.subr.mxu0 0.0
    %190 = vmatpush2.msra.mxu0 0.0
    %191 = vmatprep.subr.mxu0 0.0
    %192 = vmatpush2.msra.mxu0 0.0
    %193 = vmatprep.subr.mxu0 0.0
    %194 = vmatpush2.msra.mxu0 0.0
    %195 = vmatprep.subr.mxu0 0.0
    %196 = vmatpush2.msra.mxu0 0.0
    %197 = vmatprep.subr.mxu0 0.0
    %198 = vmatpush2.msra.mxu0 0.0
    %199 = vmatprep.subr.mxu0 0.0
    %200 = vmatpush2.msra.mxu0 0.0
    %201 = vmatprep.subr.mxu0 0.0
    %202 = vmatpush2.msra.mxu0 0.0
    %203 = vmatprep.subr.mxu0 0.0
    %204 = vmatpush2.msra.mxu0 0.0
    %205 = vmatprep.subr.mxu0 0.0
    %206 = vmatpush2.msra.mxu0 0.0
    %207 = vmatprep.subr.mxu0 0.0
    %208 = vmatpush2.msra.mxu0 0.0
    %209 = vmatprep.subr.mxu0 0.0
    %210 = vmatpush2.msra.mxu0 0.0
    %211 = vmatprep.subr.mxu0 0.0
    %212 = vmatpush2.msra.mxu0 0.0
    %213 = vmatprep.subr.mxu0 0.0
    %214 = vmatpush2.msra.mxu0 0.0
    %215 = vmatprep.subr.mxu0 0.0
    %216 = vmatpush2.msra.mxu0 0.0
    %217 = vmatprep.subr.mxu0 0.0
    %218 = vmatpush2.msra.mxu0 0.0
    %219 = vmatprep.subr.mxu0 0.0
    %220 = vmatpush2.msra.mxu0 0.0
    %221 = vmatprep.mubr.f32.mxu0 0.0
    %222 = vmatmul.mubr.f32.gmra.mxu0 %v155
    %v223 = vpop.f32.mrf.mxu0
    %v224 = vadd.f32 0.0, %v223
    %v225 = vpop.f32.mrf.mxu0
    %226 = vdwg.mxu0
    %v228 = vsel %vm153, %v146, 0
    %230 = vmatprep.subr.mxu0 0.0
    %231 = vmatpush1.msra.mxu0 0.0
    %232 = vmatprep.subr.mxu0 0.0
    %233 = vmatpush1.msra.mxu0 0.0
    %234 = vmatprep.subr.mxu0 0.0
    %235 = vmatpush1.msra.mxu0 0.0
    %236 = vmatprep.subr.mxu0 0.0
    %237 = vmatpush1.msra.mxu0 0.0
    %238 = vmatprep.subr.mxu0 0.0
    %239 = vmatpush1.msra.mxu0 0.0
    %240 = vmatprep.subr.mxu0 0.0
    %241 = vmatpush1.msra.mxu0 0.0
    %242 = vmatprep.subr.mxu0 0.0
    %243 = vmatpush1.msra.mxu0 0.0
    %244 = vmatprep.subr.mxu0 0.0
    %245 = vmatpush1.msra.mxu0 0.0
    %246 = vmatprep.subr.mxu0 0.0
    %247 = vmatpush1.msra.mxu0 0.0
    %248 = vmatprep.subr.mxu0 0.0
    %249 = vmatpush1.msra.mxu0 0.0
    %250 = vmatprep.subr.mxu0 0.0
    %251 = vmatpush1.msra.mxu0 0.0
    %252 = vmatprep.subr.mxu0 0.0
    %253 = vmatpush1.msra.mxu0 0.0
    %254 = vmatprep.subr.mxu0 0.0
    %255 = vmatpush1.msra.mxu0 0.0
    %256 = vmatprep.subr.mxu0 0.0
    %257 = vmatpush1.msra.mxu0 0.0
    %258 = vmatprep.subr.mxu0 0.0
    %259 = vmatpush1.msra.mxu0 0.0
    %260 = vmatprep.subr.mxu0 0.0
    %261 = vmatpush1.msra.mxu0 %v145
    %262 = vmatprep.subr.mxu0 0.0
    %263 = vmatpush2.msra.mxu0 0.0
    %264 = vmatprep.subr.mxu0 0.0
    %265 = vmatpush2.msra.mxu0 0.0
    %266 = vmatprep.subr.mxu0 0.0
    %267 = vmatpush2.msra.mxu0 0.0
    %268 = vmatprep.subr.mxu0 0.0
    %269 = vmatpush2.msra.mxu0 0.0
    %270 = vmatprep.subr.mxu0 0.0
    %271 = vmatpush2.msra.mxu0 0.0
    %272 = vmatprep.subr.mxu0 0.0
    %273 = vmatpush2.msra.mxu0 0.0
    %274 = vmatprep.subr.mxu0 0.0
    %275 = vmatpush2.msra.mxu0 0.0
    %276 = vmatprep.subr.mxu0 0.0
    %277 = vmatpush2.msra.mxu0 0.0
    %278 = vmatprep.subr.mxu0 0.0
    %279 = vmatpush2.msra.mxu0 0.0
    %280 = vmatprep.subr.mxu0 0.0
    %281 = vmatpush2.msra.mxu0 0.0
    %282 = vmatprep.subr.mxu0 0.0
    %283 = vmatpush2.msra.mxu0 0.0
    %284 = vmatprep.subr.mxu0 0.0
    %285 = vmatpush2.msra.mxu0 0.0
    %286 = vmatprep.subr.mxu0 0.0
    %287 = vmatpush2.msra.mxu0 0.0
    %288 = vmatprep.subr.mxu0 0.0
    %289 = vmatpush2.msra.mxu0 0.0
    %290 = vmatprep.subr.mxu0 0.0
    %291 = vmatpush2.msra.mxu0 0.0
    %292 = vmatprep.subr.mxu0 0.0
    %293 = vmatpush2.msra.mxu0 0.0
    %294 = vmatprep.mubr.f32.mxu0 0.0
    %295 = vmatmul.mubr.f32.gmra.mxu0 %v228
    %v296 = vpop.f32.mrf.mxu0
    %v297 = vadd.f32 %v224, %v296
    %v298 = vpop.f32.mrf.mxu0
    %299 = vdwg.mxu0
    %v300 = vadd.s32 %v139, 1
    %vm301 = vcmp.ge.s32.totalorder %v300, 0
    %vm302 = vcmp.lt.s32.totalorder %v300, 8
    %vm303 = vmand %vm301, %vm302
    %304 = vrot.lane.b32.xlu0 %v140, 126
    %v305 = vpop.permute.xlu0 %304
    %v307 = vsel %vm303, %v305, 0.0
    %s308 = scalar_lea.vmem %s2, 16
    %v309 = vld [vmem:[%s308] sm:$0xff]
    %v311 = vsel %vm153, %v309, 0
    %313 = vmatprep.subr.mxu0 0.0
    %314 = vmatpush1.msra.mxu0 0.0
    %315 = vmatprep.subr.mxu0 0.0
    %316 = vmatpush1.msra.mxu0 0.0
    %317 = vmatprep.subr.mxu0 0.0
    %318 = vmatpush1.msra.mxu0 0.0
    %319 = vmatprep.subr.mxu0 0.0
    %320 = vmatpush1.msra.mxu0 0.0
    %321 = vmatprep.subr.mxu0 0.0
    %322 = vmatpush1.msra.mxu0 0.0
    %323 = vmatprep.subr.mxu0 0.0
    %324 = vmatpush1.msra.mxu0 0.0
    %325 = vmatprep.subr.mxu0 0.0
    %326 = vmatpush1.msra.mxu0 0.0
    %327 = vmatprep.subr.mxu0 0.0
    %328 = vmatpush1.msra.mxu0 0.0
    %329 = vmatprep.subr.mxu0 0.0
    %330 = vmatpush1.msra.mxu0 0.0
    %331 = vmatprep.subr.mxu0 0.0
    %332 = vmatpush1.msra.mxu0 0.0
    %333 = vmatprep.subr.mxu0 0.0
    %334 = vmatpush1.msra.mxu0 0.0
    %335 = vmatprep.subr.mxu0 0.0
    %336 = vmatpush1.msra.mxu0 0.0
    %337 = vmatprep.subr.mxu0 0.0
    %338 = vmatpush1.msra.mxu0 0.0
    %339 = vmatprep.subr.mxu0 0.0
    %340 = vmatpush1.msra.mxu0 0.0
    %341 = vmatprep.subr.mxu0 0.0
    %342 = vmatpush1.msra.mxu0 0.0
    %343 = vmatprep.subr.mxu0 0.0
    %344 = vmatpush1.msra.mxu0 %v307
    %345 = vmatprep.subr.mxu0 0.0
    %346 = vmatpush2.msra.mxu0 0.0
    %347 = vmatprep.subr.mxu0 0.0
    %348 = vmatpush2.msra.mxu0 0.0
    %349 = vmatprep.subr.mxu0 0.0
    %350 = vmatpush2.msra.mxu0 0.0
    %351 = vmatprep.subr.mxu0 0.0
    %352 = vmatpush2.msra.mxu0 0.0
    %353 = vmatprep.subr.mxu0 0.0
    %354 = vmatpush2.msra.mxu0 0.0
    %355 = vmatprep.subr.mxu0 0.0
    %356 = vmatpush2.msra.mxu0 0.0
    %357 = vmatprep.subr.mxu0 0.0
    %358 = vmatpush2.msra.mxu0 0.0
    %359 = vmatprep.subr.mxu0 0.0
    %360 = vmatpush2.msra.mxu0 0.0
    %361 = vmatprep.subr.mxu0 0.0
    %362 = vmatpush2.msra.mxu0 0.0
    %363 = vmatprep.subr.mxu0 0.0
    %364 = vmatpush2.msra.mxu0 0.0
    %365 = vmatprep.subr.mxu0 0.0
    %366 = vmatpush2.msra.mxu0 0.0
    %367 = vmatprep.subr.mxu0 0.0
    %368 = vmatpush2.msra.mxu0 0.0
    %369 = vmatprep.subr.mxu0 0.0
    %370 = vmatpush2.msra.mxu0 0.0
    %371 = vmatprep.subr.mxu0 0.0
    %372 = vmatpush2.msra.mxu0 0.0
    %373 = vmatprep.subr.mxu0 0.0
    %374 = vmatpush2.msra.mxu0 0.0
    %375 = vmatprep.subr.mxu0 0.0
    %376 = vmatpush2.msra.mxu0 0.0
    %377 = vmatprep.mubr.f32.mxu0 0.0
    %378 = vmatmul.mubr.f32.gmra.mxu0 %v311
    %v379 = vpop.f32.mrf.mxu0
    %v380 = vadd.f32 0.0, %v379
    %v381 = vpop.f32.mrf.mxu0
    %382 = vdwg.mxu0
    %v383 = vadd.f32 %v297, %v380
    %s384 = scalar_lea.vmem %s3, 8
    %v385 = vld [vmem:[%s384] sm:$0xff]
    %387 = vset.pattern.permute.xlu0 0
    %388 = vperm.xlu0 %387, %v385
    %v389 = vpop.permute.xlu0 %388
    %v391 = vadd.f32 %v383, %v389
    %v392 = vadd.f32 %v391, %v105
    %v393 = vtanh.pop %v392
    %vm394 = vcmask 130048
    %395 = vst.msk [vmem:[#allocation3] sm:$0xff] %vm394, %v393
    // Predicated region
    $region18: #{tpu_custom_call.1} parent=1 // pred_check
      _
    $region19: #{tpu_custom_call.1} parent=1 // pred_check_branch
      %397 = sbr.rel (0) target = $region21
    $region20: #{tpu_custom_call.1} parent=1 // pred_region
      %s399 = ssub.s32 128, 128
      %400 = vsyncadd [#allocation4], %s399
      %s402 = sshll.u32 [#allocation3], 4
      %s403 = int_to_ptr.vmem [resolvable:$true] %s402
      %405 = dma.vmem_to_hbm [thread:$0]  %s403, 128, %s4, [#allocation4]
    $region21: #{tpu_custom_call.1} parent=1 // pred_fallthru
      _
    // Predicated region
    $region22: #{tpu_custom_call.1} parent=1 // pred_check
      _
    $region23: #{tpu_custom_call.1} parent=1 // pred_check_branch
      %407 = sbr.rel (0) target = $region25
    $region24: #{tpu_custom_call.1} parent=1 // pred_region
      %408 = dma.done [#allocation4], 128
    $region25: #{tpu_custom_call.1} parent=1 // pred_fallthru
      _
    %409 = vsyncpa [#allocation4], 1

</llo_original>
